<compile_context>
chip_gen: v7x
topology: tpu7x:2x2x1
jax: 0.10.0
libtpu: 0.0.40
codegen_flags: <defaults>
</compile_context>

<pallas_src>
import functools

import jax
import jax.numpy as jnp
from jax import lax
from jax.experimental import pallas as pl
from jax.experimental.pallas import tpu as pltpu


def _vmem_capacity_bytes() -> int:
    """Physical VMEM of the local TPU; conservative (v7x-sized) fallback."""
    try:
        info = pltpu.get_tpu_info()
        for name in ("vmem_capacity_bytes", "vmem_size_bytes"):
            v = getattr(info, name, None)
            if v:
                return int(v)
    except Exception:
        pass
    return 64 * 1024 * 1024


def _dice_kernel(x_ref, lbl_ref, *out_refs, p, hw, t_hw, n_hw, full_tiles,
                 needs_mask):
    inter_ref = out_refs[0]
    union_ref = out_refs[1] if len(out_refs) > 1 else None

    s = pl.program_id(1)          # HW-split index (megacore coverage)
    j = pl.program_id(2)          # tile index within the split
    g = s * n_hw + j              # global (unclamped) tile index

    @pl.when(j == 0)
    def _():
        inter_ref[...] = jnp.zeros_like(inter_ref)
        if union_ref is not None:
            union_ref[...] = jnp.zeros_like(union_ref)

    def _accumulate(masked):
        x = x_ref[...].astype(jnp.float32)        # (1, C, t_hw) logits tile
        lbl = lbl_ref[...].astype(jnp.int32)      # (1, 1, t_hw) labels

        # Softmax pieces over the class (sublane) axis. The softmax itself is
        # never materialized: inter only needs e[label] * r and union only
        # needs sum_c(e**p) * r**p.
        m = jnp.max(x, axis=1, keepdims=True)                 # (1, 1, t_hw)
        e = jnp.exp(x - m)                                    # (1, C, t_hw)
        denom = jnp.sum(e, axis=1, keepdims=True)             # (1, 1, t_hw)
        r = pl.reciprocal(denom, approx=True)                 # EUP estimate
        r = r * (2.0 - denom * r)                             # Newton -> ~f32

        ch = lax.broadcasted_iota(jnp.int32, x.shape, 1)
        e_lbl = jnp.sum(jnp.where(ch == lbl, e, 0.0), axis=1, keepdims=True)
        inter_pix = e_lbl * r                                  # softmax[label]

        if union_ref is not None:
            # sum_c softmax**p = r**p * sum_c e**p ; sum_c onehot**p == 1
            # (assumes p > 0 and labels in [0, C), as the PyTorch scatter_ does).
            ep = e * e if p == 2 else e ** p
            s_ep = jnp.sum(ep, axis=1, keepdims=True)
            rp = r * r if p == 2 else r ** p
            union_pix = s_ep * rp + 1.0

        if masked:
            # Out-of-range pixels (ragged last tile / clamped duplicate tiles)
            # contribute exactly 0. Garbage in invalid lanes never mixes with
            # valid lanes (all ops are lane-wise), so no pre-zeroing is needed.
            col = lax.broadcasted_iota(jnp.int32, (1, 1, t_hw), 2)
            valid = (g * t_hw + col) < hw
            inter_pix = jnp.where(valid, inter_pix, 0.0)
            if union_ref is not None:
                union_pix = jnp.where(valid, union_pix, 0.0)

        inter_ref[...] += inter_pix
        if union_ref is not None:
            union_ref[...] += union_pix

    if needs_mask:
        @pl.when(g < full_tiles)
        def _():
            _accumulate(masked=False)

        @pl.when(g >= full_tiles)
        def _():
            _accumulate(masked=True)
    else:
        _accumulate(masked=False)


def dice_loss(output, target, *, smooth=1e-06, p=1, tile_hw=None,
              hw_splits=None):
    """output: (B, C, H, W) float logits; target: (B, H, W) integer labels."""
    B, C, H, W = output.shape
    HW = H * W

    # Pure views of the native layouts -- no transpose, no padding, no casts.
    x = output.reshape(B, C, HW)
    lbl = target.reshape(B, 1, HW)

    LANES = 128
    vmem_cap = _vmem_capacity_bytes()
    # Scoped VMEM limit: 3/4 of physical, capped at 96 MiB (v5e/v6e: 96 MiB,
    # v7x: 48 MiB), never below the 32 MiB default.
    vmem_limit = max(32 * 1024 * 1024,
                     min(vmem_cap * 3 // 4, 96 * 1024 * 1024))

    if tile_hw is None:
        in_itemsize = output.dtype.itemsize
        lbl_itemsize = target.dtype.itemsize
        c_pad = ((C + 7) // 8) * 8
        n_acc = 1 if p == 1 else 2
        # Bandwidth target: ~6 MiB of logits per grid step (amortizes the
        # ~0.35 us fixed per-step overhead), clamped to [8192, 65536] lanes.
        t_bw = (6 * 1024 * 1024) // max(1, C * in_itemsize)
        t_bw = min(max(t_bw, 8192), 65536)
        # VMEM cap: 2x double-buffered inputs + ~4 streamed f32 temporaries
        # + accumulator blocks must fit well inside the scoped limit.
        per_lane = (2 * (c_pad * in_itemsize + 8 * lbl_itemsize)
                    + 4 * c_pad * 4
                    + n_acc * 2 * 8 * 4)
        t_vmem = (vmem_limit * 3 // 5) // per_lane
        desired = max(LANES, min(t_bw, t_vmem))
    else:
        desired = max(LANES, int(tile_hw))

    if HW <= desired:
        t_hw = HW                                  # full dim (always legal)
    else:
        t_hw = max(LANES, (desired // LANES) * LANES)

    n_tiles = -(-HW // t_hw)                       # tiles covering HW
    full_tiles = HW // t_hw                        # tiles fully inside HW

    # Megacore coverage: split HW across 2 parallel chunks when B < 2 so the
    # second TensorCore (v7x) is not idle. No-op on single-TC v5e/v6e.
    if hw_splits is None:
        hw_splits = 2 if B < 2 else 1
    n_split = max(1, min(int(hw_splits), n_tiles))
    n_hw = -(-n_tiles // n_split)                  # tiles per split
    clamp_needed = n_split * n_hw > n_tiles        # some (s, j) past last tile
    needs_mask = n_split * n_hw > full_tiles       # some tile crosses/over HW

    grid = (B, n_split, n_hw)

    def _hw_map(b, s, j):
        g = s * n_hw + j
        if clamp_needed:
            g = jnp.minimum(g, n_tiles - 1)        # duplicates are masked to 0
        return (b, 0, g)

    def _out_map(b, s, j):
        return (b * n_split + s, 0, 0)

    acc_shape = jax.ShapeDtypeStruct((B * n_split, 1, t_hw), jnp.float32)
    if p == 1:
        out_shape = (acc_shape,)
        out_specs = [pl.BlockSpec((1, 1, t_hw), _out_map)]
    else:
        out_shape = (acc_shape, acc_shape)
        out_specs = [pl.BlockSpec((1, 1, t_hw), _out_map),
                     pl.BlockSpec((1, 1, t_hw), _out_map)]

    kernel = functools.partial(
        _dice_kernel, p=p, hw=HW, t_hw=t_hw, n_hw=n_hw,
        full_tiles=full_tiles, needs_mask=needs_mask)

    outs = pl.pallas_call(
        kernel,
        out_shape=out_shape,
        grid_spec=pltpu.PrefetchScalarGridSpec(
            num_scalar_prefetch=0,
            grid=grid,
            in_specs=[
                pl.BlockSpec((1, C, t_hw), _hw_map),
                pl.BlockSpec((1, 1, t_hw), _hw_map),
            ],
            out_specs=out_specs,
        ),
        compiler_params=pltpu.CompilerParams(
            # Batch and HW-split axes sharded across TensorCores (v7x
            # megacore); the innermost HW-tile axis is the accumulation loop.
            dimension_semantics=("parallel", "parallel", "arbitrary"),
            vmem_limit_bytes=int(vmem_limit),
        ),
    )(x, lbl)

    # Tiny final reductions (a few KiB) done once in the wrapper.
    inter = jnp.sum(outs[0], dtype=jnp.float32)
    if p == 1:
        # sum_c softmax == 1 and sum_c onehot == 1 per pixel => exact union.
        union = jnp.float32(2 * B * HW)
    else:
        union = jnp.sum(outs[1], dtype=jnp.float32)
    return 1.0 - (2.0 * inter + smooth) / (union + smooth)


def _dice_loss_ref(output, target, *, smooth=1e-06, p=1):
    _, C, _, _ = output.shape
    sm = jax.nn.softmax(output.astype(jnp.float32), axis=1)
    onehot = jax.nn.one_hot(target, C, axis=1, dtype=jnp.float32)
    inter = jnp.sum(sm * onehot)
    union = jnp.sum(sm ** p + onehot ** p)
    return 1.0 - (2.0 * inter + smooth) / (union + smooth)


if __name__ == "__main__":
    key = jax.random.PRNGKey(0)
    k1, k2, k3, k4 = jax.random.split(key, 4)

    # Primary: B=2, C=4, 16x16, p=1 (default) -- single-tile fast path,
    # analytic-union shortcut, no masking.
    B, C, H, W = 2, 4, 16, 16
    logits = jax.random.normal(k1, (B, C, H, W), dtype=jnp.float32)
    labels = jax.random.randint(k2, (B, H, W), 0, C, dtype=jnp.int32)
    loss = jax.block_until_ready(dice_loss(logits, labels))
    ref = jax.block_until_ready(_dice_loss_ref(logits, labels))
    assert jnp.allclose(loss, ref, atol=1e-5, rtol=1e-5), (loss, ref)

    # Secondary: B=1, C=5, 46x46, p=2 with a forced small tile -- exercises the
    # multi-tile accumulation, the ragged-tail mask, the HW split (v7x megacore
    # path for B==1, with a clamped duplicate tile) and the union accumulator.
    B2, C2, H2, W2 = 1, 5, 46, 46
    logits2 = jax.random.normal(k3, (B2, C2, H2, W2), dtype=jnp.float32)
    labels2 = jax.random.randint(k4, (B2, H2, W2), 0, C2, dtype=jnp.int32)
    loss2 = jax.block_until_ready(
        dice_loss(logits2, labels2, p=2, tile_hw=128, hw_splits=2))
    ref2 = jax.block_until_ready(_dice_loss_ref(logits2, labels2, p=2))
    assert jnp.allclose(loss2, ref2, atol=5e-5, rtol=5e-5), (loss2, ref2)

    print("KERNEL_OK")
</pallas_src>

<mosaic_0001>
module attributes {stable_mosaic.version = 11 : i64} {
  func.func @_dice_kernel(%arg0: i32, %arg1: i32, %arg2: i32, %arg3: memref<1x4x256xf32, #tpu.memory_space<vmem>>, %arg4: memref<1x1x256xi32, #tpu.memory_space<vmem>>, %arg5: memref<1x1x256xf32, #tpu.memory_space<vmem>>) attributes {dimension_semantics = [#tpu.dimension_semantics<parallel>, #tpu.dimension_semantics<parallel>, #tpu.dimension_semantics<arbitrary>], iteration_bounds = array<i64: 2, 1, 1>, scalar_prefetch = 0 : i64, scratch_operands = 0 : i64, tpu.core_type = #tpu.core_type<tc>, window_params = [{transform_indices = @transform_0, window_bounds = array<i64: 1, 4, 256>}, {transform_indices = @transform_1, window_bounds = array<i64: 1, 1, 256>}, {transform_indices = @transform_2, window_bounds = array<i64: 1, 1, 256>}]} {
    %c0_i32 = arith.constant 0 : i32
    %0 = arith.cmpi eq, %arg2, %c0_i32 : i32
    %1 = arith.extui %0 : i1 to i32
    %c0_i32_0 = arith.constant 0 : i32
    %2 = arith.cmpi ne, %1, %c0_i32_0 : i32
    scf.if %2 {
      %cst_16 = arith.constant 0.000000e+00 : f32
      %28 = vector.broadcast %cst_16 : f32 to vector<1x1x256xf32>
      %c0_17 = arith.constant 0 : index
      %c0_18 = arith.constant 0 : index
      %c0_19 = arith.constant 0 : index
      %29 = vector.load %arg5[%c0_17, %c0_18, %c0_19] : memref<1x1x256xf32, #tpu.memory_space<vmem>>, vector<1x1x256xf32>
      tpu.vector_store %arg5[%c0_17, %c0_18, %c0_19], %28 {strides = array<i32>} : memref<1x1x256xf32, #tpu.memory_space<vmem>>, vector<1x1x256xf32>,
    } else {
    }
    %c0 = arith.constant 0 : index
    %c0_1 = arith.constant 0 : index
    %c0_2 = arith.constant 0 : index
    %3 = vector.load %arg3[%c0, %c0_1, %c0_2] : memref<1x4x256xf32, #tpu.memory_space<vmem>>, vector<1x4x256xf32>
    %c0_3 = arith.constant 0 : index
    %c0_4 = arith.constant 0 : index
    %c0_5 = arith.constant 0 : index
    %4 = vector.load %arg4[%c0_3, %c0_4, %c0_5] : memref<1x1x256xi32, #tpu.memory_space<vmem>>, vector<1x1x256xi32>
    %cst = arith.constant dense<0xFF800000> : vector<1x256xf32>
    %5 = vector.multi_reduction <maximumf>, %3, %cst [1] : vector<1x4x256xf32> to vector<1x256xf32>
    %6 = vector.shape_cast %5 : vector<1x256xf32> to vector<1x1x256xf32>
    %7 = vector.broadcast %6 : vector<1x1x256xf32> to vector<1x4x256xf32>
    %8 = arith.subf %3, %7 : vector<1x4x256xf32>
    %9 = math.exp %8 : vector<1x4x256xf32>
    %cst_6 = arith.constant dense<0.000000e+00> : vector<1x256xf32>
    %10 = vector.multi_reduction <add>, %9, %cst_6 [1] : vector<1x4x256xf32> to vector<1x256xf32>
    %11 = vector.shape_cast %10 : vector<1x256xf32> to vector<1x1x256xf32>
    %12 = tpu.reciprocal %11 {approx = true} : vector<1x1x256xf32> -> vector<1x1x256xf32>
    %13 = arith.mulf %11, %12 : vector<1x1x256xf32>
    %cst_7 = arith.constant 2.000000e+00 : f32
    %14 = vector.broadcast %cst_7 : f32 to vector<1x1x256xf32>
    %15 = arith.subf %14, %13 : vector<1x1x256xf32>
    %16 = arith.mulf %12, %15 : vector<1x1x256xf32>
    %17 = tpu.iota {dimensions = array<i32: 1>} : vector<1x4x256xi32>
    %18 = vector.broadcast %4 : vector<1x1x256xi32> to vector<1x4x256xi32>
    %19 = arith.cmpi eq, %17, %18 : vector<1x4x256xi32>
    %cst_8 = arith.constant 0.000000e+00 : f32
    %20 = vector.broadcast %cst_8 : f32 to vector<1x4x256xf32>
    %21 = arith.select %19, %9, %20 : vector<1x4x256xi1>, vector<1x4x256xf32>
    %cst_9 = arith.constant dense<0.000000e+00> : vector<1x256xf32>
    %22 = vector.multi_reduction <add>, %21, %cst_9 [1] : vector<1x4x256xf32> to vector<1x256xf32>
    %23 = vector.shape_cast %22 : vector<1x256xf32> to vector<1x1x256xf32>
    %24 = arith.mulf %23, %16 : vector<1x1x256xf32>
    %c0_10 = arith.constant 0 : index
    %c0_11 = arith.constant 0 : index
    %c0_12 = arith.constant 0 : index
    %25 = vector.load %arg5[%c0_10, %c0_11, %c0_12] : memref<1x1x256xf32, #tpu.memory_space<vmem>>, vector<1x1x256xf32>
    %26 = arith.addf %25, %24 : vector<1x1x256xf32>
    %c0_13 = arith.constant 0 : index
    %c0_14 = arith.constant 0 : index
    %c0_15 = arith.constant 0 : index
    %27 = vector.load %arg5[%c0_13, %c0_14, %c0_15] : memref<1x1x256xf32, #tpu.memory_space<vmem>>, vector<1x1x256xf32>
    tpu.vector_store %arg5[%c0_13, %c0_14, %c0_15], %26 {strides = array<i32>} : memref<1x1x256xf32, #tpu.memory_space<vmem>>, vector<1x1x256xf32>,
    return
  }
  func.func @transform_0(%arg0: i32, %arg1: i32, %arg2: i32) -> (i32, i32, i32) {
    %c1_i32 = arith.constant 1 : i32
    %0 = arith.muli %arg1, %c1_i32 : i32
    %1 = arith.addi %0, %arg2 : i32
    %c0_i32 = arith.constant 0 : i32
    %c0_i32_0 = arith.constant 0 : i32
    return %arg0, %c0_i32, %1 : i32, i32, i32
  }
  func.func @transform_1(%arg0: i32, %arg1: i32, %arg2: i32) -> (i32, i32, i32) {
    %c1_i32 = arith.constant 1 : i32
    %0 = arith.muli %arg1, %c1_i32 : i32
    %1 = arith.addi %0, %arg2 : i32
    %c0_i32 = arith.constant 0 : i32
    %c0_i32_0 = arith.constant 0 : i32
    return %arg0, %c0_i32, %1 : i32, i32, i32
  }
  func.func @transform_2(%arg0: i32, %arg1: i32, %arg2: i32) -> (i32, i32, i32) {
    %c1_i32 = arith.constant 1 : i32
    %0 = arith.muli %arg0, %c1_i32 : i32
    %1 = arith.addi %0, %arg1 : i32
    %c0_i32 = arith.constant 0 : i32
    %c0_i32_0 = arith.constant 0 : i32
    %c0_i32_1 = arith.constant 0 : i32
    return %1, %c0_i32, %c0_i32_0 : i32, i32, i32
  }
}

</mosaic_0001>

<llo_original>
// kernel: tpu_custom_call.1
$region0: #{tpu_custom_call.1}
  #allocation0 [shape = 'u32[]', space=smem, size = 0x4, offset = 0x4, fixed_abs, tag = 'smem constant byte address 0x4 - core index']
  #allocation1 [shape = 'u32[144,128]{1,0:T(1,128)}', space=vmem, size = 0x12000, scoped, tag = 'internal scratch']
  %s0 = inlined_call_operand.hbm [shape: f32[2,4,256], index: 0, kind: input, shape index: {}]
  %s1 = inlined_call_operand.hbm [shape: s32[2,1,256], index: 1, kind: input, shape index: {}]
  %s2 = inlined_call_operand.hbm [shape: f32[2,1,256], index: 2, kind: output, shape index: {}]
  %s3 = sld [smem:[#allocation0]]
  $region53: #{tpu_custom_call.1} parent=0
    _
  %s5 = ssub.s32 1, %s3
  %s6 = scalar_select 0, %s5, %s3
  $region1: #{tpu_custom_call.1} parent=0
    #allocation2 [shape = 'u8[8192]{0}', space=vmem, size = 0x2000, scoped, tag = 'input window, operand 0']
    #allocation3 [shape = 's32[2]{0}', space=sflag, size = 0x8, scoped, tag = 'scoped memory for tpu_custom_call.1']
    #allocation4 [shape = 's32[2]{0}', space=sflag, size = 0x8, scoped, tag = 'scoped memory for tpu_custom_call.1']
    #allocation5 [shape = 'u8[2048]{0}', space=vmem, size = 0x800, scoped, tag = 'input window, operand 1']
    #allocation6 [shape = 's32[2]{0}', space=sflag, size = 0x8, scoped, tag = 'scoped memory for tpu_custom_call.1']
    #allocation7 [shape = 'u8[2048]{0}', space=vmem, size = 0x800, scoped, tag = 'output window, operand 0']
    %7 = vsyncpa [#allocation3], 0
    %s8 = scalar_lea.sflag [#allocation3], 1
    %9 = vsyncpa %s8, 0
    %10 = vsyncpa [#allocation6], 0
    %s11 = scalar_lea.sflag [#allocation6], 1
    %12 = vsyncpa %s11, 0
    %13 = vsyncpa [#allocation4], 0
    %s14 = scalar_lea.sflag [#allocation4], 1
    %15 = vsyncpa %s14, 0
    loop: start=0, step=1, limit=4
    $region2: #{tpu_custom_call.1} parent=1 // loop_pre_header
      _
    $region3: #{tpu_custom_call.1} parent=1 // loop_header
      %s17 = sphi 0, %s21
      %p18 = scmp.ge.s32.totalorder %s17, 4
      %s24 = sphi 0, %s43
      %s25 = sphi 0, %s39
      %s26 = sphi 0, %s35
      %s27 = sphi 0, %s24
      %s28 = sphi 0, %s25
      %s29 = sphi 0, %s26
      %s30 = sphi 0, %s27
      %s31 = sphi 0, %s28
      %s32 = sphi 0, %s29
      %s50 = sphi 0, %s52
      %s53 = sphi 0, %s50
      %s54 = sphi 0, %s53
      %s70 = sphi 0, %s54
      %s80 = sphi 0, %s82
      %s83 = sphi 0, %s80
      %s84 = sphi 0, %s83
      %s100 = sphi 0, %s84
      %s108 = sphi 0, %s110
      %s111 = sphi 0, %s108
      %s112 = sphi 0, %s111
      %s128 = sphi 0, %s112
    $region4: #{tpu_custom_call.1} parent=1 // loop_header_branch
      %20 = sbr.rel (%p18) target = $region8
    $region5: #{tpu_custom_call.1} parent=1 // loop_body
      %s22 = ssub.s32 %s17, 1
      %s23 = ssub.s32 %s17, 2
      %s33 = sadd.s32 1, %s26
      %p34 = scmp.ge.s32.totalorder %s33, 1
      %s35 = scalar_select %p34, 0, %s33
      %s36 = sadd.s32 1, %s25
      %s37 = scalar_select %p34, %s36, %s25
      %p38 = scmp.ge.s32.totalorder %s37, 1
      %s39 = scalar_select %p38, 0, %s37
      %s40 = sadd.s32 1, %s24
      %s41 = scalar_select %p38, %s40, %s24
      %p42 = scmp.ge.s32.totalorder %s41, 2
      %s43 = scalar_select %p42, 0, %s41
      %s44 = sadd.s32 %s25, %s26
      %s45 = sadd.s32 %s39, %s35
      %s46 = ssub.s32 %s24, %s43
      %s47 = ssub.s32 %s44, %s45
      %s48 = sor.u32 %s46, %s47
      %p49 = scmp.eq.s32.totalorder %s48, 0
      %s51 = sadd.s32 %s50, 1
      %s52 = scalar_select %p49, %s50, %s51
      %p55 = pneg %p49
      %p56 = scmp.eq.s32.totalorder %s17, 1
      %p57 = por %p55, %p56
      %p58 = scmp.ne.s32.totalorder %s50, %s53
      %p59 = scmp.eq.s32.totalorder %s17, 0
      %p60 = por %p58, %p59
      %p61 = scmp.ne.s32.totalorder %s50, %s53
      %p62 = scmp.eq.s32.totalorder %s22, 1
      %p63 = por %p61, %p62
      %p64 = scmp.ne.s32.totalorder %s53, %s54
      %p65 = scmp.eq.s32.totalorder %s22, 0
      %p66 = por %p64, %p65
      %p67 = scmp.ne.s32.totalorder %s53, %s54
      %p68 = scmp.eq.s32.totalorder %s23, 1
      %p69 = por %p67, %p68
      %p71 = scmp.ne.s32.totalorder %s54, %s70
      %p72 = scmp.eq.s32.totalorder %s23, 0
      %p73 = por %p71, %p72
      %s74 = sadd.s32 %s25, %s26
      %s75 = sadd.s32 %s39, %s35
      %s76 = ssub.s32 %s24, %s43
      %s77 = ssub.s32 %s74, %s75
      %s78 = sor.u32 %s76, %s77
      %p79 = scmp.eq.s32.totalorder %s78, 0
      %s81 = sadd.s32 %s80, 1
      %s82 = scalar_select %p79, %s80, %s81
      %p85 = pneg %p79
      %p86 = scmp.eq.s32.totalorder %s17, 1
      %p87 = por %p85, %p86
      %p88 = scmp.ne.s32.totalorder %s80, %s83
      %p89 = scmp.eq.s32.totalorder %s17, 0
      %p90 = por %p88, %p89
      %p91 = scmp.ne.s32.totalorder %s80, %s83
      %p92 = scmp.eq.s32.totalorder %s22, 1
      %p93 = por %p91, %p92
      %p94 = scmp.ne.s32.totalorder %s83, %s84
      %p95 = scmp.eq.s32.totalorder %s22, 0
      %p96 = por %p94, %p95
      %p97 = scmp.ne.s32.totalorder %s83, %s84
      %p98 = scmp.eq.s32.totalorder %s23, 1
      %p99 = por %p97, %p98
      %p101 = scmp.ne.s32.totalorder %s84, %s100
      %p102 = scmp.eq.s32.totalorder %s23, 0
      %p103 = por %p101, %p102
      %s104 = sadd.s32 %s24, %s25
      %s105 = sadd.s32 %s43, %s39
      %s106 = ssub.s32 %s104, %s105
      %p107 = scmp.eq.s32.totalorder %s106, 0
      %s109 = sadd.s32 %s108, 1
      %s110 = scalar_select %p107, %s108, %s109
      %p113 = pneg %p107
      %p114 = scmp.eq.s32.totalorder %s17, 1
      %p115 = por %p113, %p114
      %p116 = scmp.ne.s32.totalorder %s108, %s111
      %p117 = scmp.eq.s32.totalorder %s17, 0
      %p118 = por %p116, %p117
      %p119 = scmp.ne.s32.totalorder %s108, %s111
      %p120 = scmp.eq.s32.totalorder %s22, 1
      %p121 = por %p119, %p120
      %p122 = scmp.ne.s32.totalorder %s111, %s112
      %p123 = scmp.eq.s32.totalorder %s22, 0
      %p124 = por %p122, %p123
      %p125 = scmp.ne.s32.totalorder %s111, %s112
      %p126 = scmp.eq.s32.totalorder %s23, 1
      %p127 = por %p125, %p126
      %p129 = scmp.ne.s32.totalorder %s112, %s128
      %p130 = scmp.eq.s32.totalorder %s23, 0
      %p131 = por %p129, %p130
      %p132 = scmp.le.s32.totalorder 1, %s17
      %p133 = scmp.lt.s32.totalorder %s17, 3
      %p134 = pnand %p132, %p133
      %p135 = pneg %p134
      // Predicated region
      $region9: #{tpu_custom_call.1} parent=5 // pred_check
        _
      $region10: #{tpu_custom_call.1} parent=5 // pred_check_branch
        %137 = sbr.rel (%p134) target = $region12
      $region11: #{tpu_custom_call.1} parent=5 // pred_region
        %s138 = ssub.s32 %s17, 1
      $region12: #{tpu_custom_call.1} parent=5 // pred_fallthru
        _
      %p139 = scmp.lt.s32.totalorder %s17, 2
      // Predicated region
      $region13: #{tpu_custom_call.1} parent=5 // pred_check
        %p140 = pneg %p139
      $region14: #{tpu_custom_call.1} parent=5 // pred_check_branch
        %142 = sbr.rel (%p140) target = $region16
      $region15: #{tpu_custom_call.1} parent=5 // pred_region
        // Predicated region
        $region17: #{tpu_custom_call.1} parent=15 // pred_check
          %p143 = pneg %p60
        $region18: #{tpu_custom_call.1} parent=15 // pred_check_branch
          %145 = sbr.rel (%p143) target = $region20
        $region19: #{tpu_custom_call.1} parent=15 // pred_region
          %s146 = sand.u32 %s50, 1
          %s147 = scalar_lea.sflag [#allocation3], %s146
          %s148 = sand.u32 %s50, 1
          %s149 = smul.addr %s148, 8
          %s150 = scalar_lea.vmem [#allocation2], %s149
          %s151 = sadd.s32 %s25, %s26
          %s152 = smul.u32 2, %s151
          %s154 = ssub.s32 128, 128
          %155 = vsyncadd %s147, %s154
          %s156 = smul.addr %s24, 2
          %s157 = sadd.s32 %s152, %s156
          %s158 = smul.addr %s157, 64
          %s159 = scalar_lea.hbm %s0, %s158
          %s161 = sshll.u32 %s150, 4
          %s162 = int_to_ptr.vmem [resolvable:$true] %s161
          %164 = dma.hbm_to_vmem [thread:$0]  %s159, 128, %s162, %s147
        $region20: #{tpu_custom_call.1} parent=15 // pred_fallthru
          _
        // Predicated region
        $region21: #{tpu_custom_call.1} parent=15 // pred_check
          %p165 = pneg %p90
        $region22: #{tpu_custom_call.1} parent=15 // pred_check_branch
          %167 = sbr.rel (%p165) target = $region24
        $region23: #{tpu_custom_call.1} parent=15 // pred_region
          %s168 = sand.u32 %s80, 1
          %s169 = scalar_lea.sflag [#allocation6], %s168
          %s170 = sand.u32 %s80, 1
          %s171 = smul.addr %s170, 2
          %s172 = scalar_lea.vmem [#allocation5], %s171
          %s173 = sadd.s32 %s25, %s26
          %s174 = smul.u32 2, %s173
          %s176 = ssub.s32 32, 32
          %177 = vsyncadd %s169, %s176
          %s178 = smul.addr %s24, 2
          %s179 = sadd.s32 %s174, %s178
          %s180 = smul.addr %s179, 16
          %s181 = scalar_lea.hbm %s1, %s180
          %s183 = sshll.u32 %s172, 4
          %s184 = int_to_ptr.vmem [resolvable:$true] %s183
          %186 = dma.hbm_to_vmem [thread:$0]  %s181, 32, %s184, %s169
        $region24: #{tpu_custom_call.1} parent=15 // pred_fallthru
          _
      $region16: #{tpu_custom_call.1} parent=5 // pred_fallthru
        _
      %p187 = scmp.le.s32.totalorder 1, %s17
      %p188 = scmp.lt.s32.totalorder %s17, 3
      %p189 = pnand %p187, %p188
      %p190 = pneg %p189
      // Predicated region
      $region25: #{tpu_custom_call.1} parent=5 // pred_check
        _
      $region26: #{tpu_custom_call.1} parent=5 // pred_check_branch
        %192 = sbr.rel (%p189) target = $region28
      $region27: #{tpu_custom_call.1} parent=5 // pred_region
        %s193 = ssub.s32 %s17, 1
        %s194 = sand.u32 %s53, 1
        %s195 = scalar_lea.sflag [#allocation3], %s194
        %s196 = sand.u32 %s53, 1
        %s197 = smul.addr %s196, 8
        %s198 = scalar_lea.vmem [#allocation2], %s197
        // Predicated region
        $region29: #{tpu_custom_call.1} parent=27 // pred_check
          %p199 = pneg %p66
        $region30: #{tpu_custom_call.1} parent=27 // pred_check_branch
          %201 = sbr.rel (%p199) target = $region32
        $region31: #{tpu_custom_call.1} parent=27 // pred_region
          %202 = dma.done %s195, 128
        $region32: #{tpu_custom_call.1} parent=27 // pred_fallthru
          _
        %s203 = sand.u32 %s83, 1
        %s204 = scalar_lea.sflag [#allocation6], %s203
        %s205 = sand.u32 %s83, 1
        %s206 = smul.addr %s205, 2
        %s207 = scalar_lea.vmem [#allocation5], %s206
        // Predicated region
        $region33: #{tpu_custom_call.1} parent=27 // pred_check
          %p208 = pneg %p96
        $region34: #{tpu_custom_call.1} parent=27 // pred_check_branch
          %210 = sbr.rel (%p208) target = $region36
        $region35: #{tpu_custom_call.1} parent=27 // pred_region
          %211 = dma.done %s204, 32
        $region36: #{tpu_custom_call.1} parent=27 // pred_fallthru
          _
        %s212 = sand.u32 %s53, 1
        %s213 = scalar_lea.sflag [#allocation3], %s212
        %s214 = sand.u32 %s53, 1
        %s215 = smul.addr %s214, 8
        %s216 = scalar_lea.vmem [#allocation2], %s215
        %p217 = pneg %p66
        %p218 = pneg %p63
        %s219 = sand.u32 %s83, 1
        %s220 = scalar_lea.sflag [#allocation6], %s219
        %s221 = sand.u32 %s83, 1
        %s222 = smul.addr %s221, 2
        %s223 = scalar_lea.vmem [#allocation5], %s222
        %p224 = pneg %p96
        %p225 = pneg %p93
        %p226 = pneg %p124
        %p227 = pneg %p121
        %s228 = sand.u32 %s111, 1
        %s229 = scalar_lea.sflag [#allocation4], %s228
        %s230 = sand.u32 %s111, 1
        %s231 = smul.addr %s230, 2
        %s232 = scalar_lea.vmem [#allocation7], %s231
        %s233 = sadd.s32 %s28, %s29
        %s234 = smul.u32 2, %s233
        %s235 = sadd.s32 %s28, %s29
        %s236 = smul.u32 2, %s235
        %s237 = sadd.s32 %s27, %s28
        %p238 = scmp.eq.s32.totalorder %s29, 0
        // Predicated region
        $region37: #{tpu_custom_call.1} parent=27 // pred_check
          %p239 = pneg %p238
        $region38: #{tpu_custom_call.1} parent=27 // pred_check_branch
          %241 = sbr.rel (%p239) target = $region40
        $region39: #{tpu_custom_call.1} parent=27 // pred_region
          %v242 = vlaneseq
          %vm243 = vcmp.ge.s32.totalorder %v242, 0
          %vm244 = vcmp.lt.s32.totalorder %v242, 256
          %vm245 = vmand %vm243, %vm244
          %246 = vst.msk [vmem:[%s232] sm:$0x3] %vm245, 0.0
        $region40: #{tpu_custom_call.1} parent=27 // pred_fallthru
          _
        %v247 = vld [vmem:[%s198] sm:$0xff]
        %v248 = vld [vmem:[%s207] sm:$0x3]
        %v250 = vcombine.high %v247, %v247
        %vm252 = vcmask 1043456
        %v253 = vsel %vm252, %v247, -inf
        %v254 = vrot.slane %v253, 4
        %v255 = vmax.f32 %v253, %v254
        %v256 = vrot.slane %v255, 2
        %v257 = vmax.f32 %v255, %v256
        %v258 = vrot.slane %v257, 1
        %v259 = vmax.f32 %v257, %v258
        %v260 = vsel %vm252, %v250, -inf
        %v261 = vrot.slane %v260, 4
        %v262 = vmax.f32 %v260, %v261
        %v263 = vrot.slane %v262, 2
        %v264 = vmax.f32 %v262, %v263
        %v265 = vrot.slane %v264, 1
        %v266 = vmax.f32 %v264, %v265
        %v269 = vcombine.low %v259, %v266
        %v271 = vsub.f32 %v247, %v269
        %v272 = vmul.f32 %v271, 1.442695
        %v273 = vpow.pop %v272
        %v275 = vcombine.high %v273, %v273
        %v277 = vsel %vm252, %v273, 0.0
        %v278 = vrot.slane %v277, 4
        %v279 = vadd.f32 %v277, %v278
        %v280 = vrot.slane %v279, 2
        %v281 = vadd.f32 %v279, %v280
        %v282 = vrot.slane %v281, 1
        %v283 = vadd.f32 %v281, %v282
        %v284 = vsel %vm252, %v275, 0.0
        %v285 = vrot.slane %v284, 4
        %v286 = vadd.f32 %v284, %v285
        %v287 = vrot.slane %v286, 2
        %v288 = vadd.f32 %v286, %v287
        %v289 = vrot.slane %v288, 1
        %v290 = vadd.f32 %v288, %v289
        %v291 = vrcp.pop %v283
        %v292 = vrcp.pop %v290
        %v293 = vmul.f32 %v283, %v291
        %v294 = vmul.f32 %v290, %v292
        %v295 = vsub.f32 2.0, %v293
        %v296 = vsub.f32 2.0, %v294
        %v297 = vmul.f32 %v291, %v295
        %v298 = vmul.f32 %v292, %v296
        %v299 = vlaneseq
        %v300 = vshrl.u32 %v299, 7
        %v301 = vlaneseq
        %v302 = vshrl.u32 %v301, 7
        %v303 = vsub.s32 0, %v302
        %v304 = vrot.slane %v248, %v303
        %v305 = vlaneseq
        %v306 = vshrl.u32 %v305, 7
        %v307 = vsub.s32 1, %v306
        %v308 = vrot.slane %v248, %v307
        %vm309 = vcmp.eq.s32.totalorder %v300, %v304
        %vm310 = vcmp.eq.s32.totalorder %v300, %v308
        %v311 = vsel %vm309, %v273, 0.0
        %v312 = vsel %vm310, %v275, 0.0
        %v313 = vsel %vm252, %v311, 0.0
        %v314 = vrot.slane %v313, 4
        %v315 = vadd.f32 %v313, %v314
        %v316 = vrot.slane %v315, 2
        %v317 = vadd.f32 %v315, %v316
        %v318 = vrot.slane %v317, 1
        %v319 = vadd.f32 %v317, %v318
        %v320 = vsel %vm252, %v312, 0.0
        %v321 = vrot.slane %v320, 4
        %v322 = vadd.f32 %v320, %v321
        %v323 = vrot.slane %v322, 2
        %v324 = vadd.f32 %v322, %v323
        %v325 = vrot.slane %v324, 1
        %v326 = vadd.f32 %v324, %v325
        %v327 = vmul.f32 %v319, %v297
        %v328 = vmul.f32 %v326, %v298
        %v329 = vld [vmem:[%s232] sm:$0x3]
        %v332 = vcombine.low %v327, %v328
        %v334 = vunpack.c.l.s4 1966171168
        %v335 = vunpack.c.0.s8 %v334
        %v336 = vlaneseq
        %v337 = vshrl.u32 %v336, 7
        %v338 = vsub.s32 %v335, %v337
        %v339 = vrot.slane %v332, %v338
        %v341 = vunpack.c.l.s4 1966171168
        %v342 = vunpack.c.0.s8 %v341
        %v343 = vlaneseq
        %v344 = vshrl.u32 %v343, 7
        %v345 = vsub.s32 %v342, %v344
        %v346 = vrot.slane %v339, %v345
        %v348 = vadd.f32 %v329, %v346
        %v349 = vlaneseq
        %vm350 = vcmp.ge.s32.totalorder %v349, 0
        %vm351 = vcmp.lt.s32.totalorder %v349, 256
        %vm352 = vmand %vm350, %vm351
        %353 = vst.msk [vmem:[%s232] sm:$0x3] %vm352, %v348
        %s354 = sand.u32 %s111, 1
        %s355 = scalar_lea.sflag [#allocation4], %s354
        %s356 = sand.u32 %s111, 1
        %s357 = smul.addr %s356, 2
        %s358 = scalar_lea.vmem [#allocation7], %s357
        // Predicated region
        $region41: #{tpu_custom_call.1} parent=27 // pred_check
          %p359 = pneg %p121
        $region42: #{tpu_custom_call.1} parent=27 // pred_check_branch
          %361 = sbr.rel (%p359) target = $region44
        $region43: #{tpu_custom_call.1} parent=27 // pred_region
          %s362 = sadd.s32 %s27, %s28
          %s364 = ssub.s32 32, 32
          %365 = vsyncadd %s355, %s364
          %s366 = smul.addr %s362, 2
          %s367 = smul.addr %s366, 16
          %s368 = scalar_lea.hbm %s2, %s367
          %s370 = sshll.u32 %s358, 4
          %s371 = int_to_ptr.vmem [resolvable:$true] %s370
          %373 = dma.vmem_to_hbm [thread:$0]  %s371, 32, %s368, %s355
        $region44: #{tpu_custom_call.1} parent=27 // pred_fallthru
          _
      $region28: #{tpu_custom_call.1} parent=5 // pred_fallthru
        _
      %p374 = scmp.le.s32.totalorder 2, %s17
      // Predicated region
      $region45: #{tpu_custom_call.1} parent=5 // pred_check
        %p375 = pneg %p374
      $region46: #{tpu_custom_call.1} parent=5 // pred_check_branch
        %377 = sbr.rel (%p375) target = $region48
      $region47: #{tpu_custom_call.1} parent=5 // pred_region
        %s378 = ssub.s32 %s17, 2
        // Predicated region
        $region49: #{tpu_custom_call.1} parent=47 // pred_check
          %p379 = pneg %p127
        $region50: #{tpu_custom_call.1} parent=47 // pred_check_branch
          %381 = sbr.rel (%p379) target = $region52
        $region51: #{tpu_custom_call.1} parent=47 // pred_region
          %s382 = sand.u32 %s112, 1
          %s383 = scalar_lea.sflag [#allocation4], %s382
          %s384 = sand.u32 %s112, 1
          %s385 = smul.addr %s384, 2
          %s386 = scalar_lea.vmem [#allocation7], %s385
          %387 = dma.done %s383, 32
        $region52: #{tpu_custom_call.1} parent=47 // pred_fallthru
          _
      $region48: #{tpu_custom_call.1} parent=5 // pred_fallthru
        _
    $region6: #{tpu_custom_call.1} parent=1 // loop_footer
      %s21 = sadd.s32 1, %s17
    $region7: #{tpu_custom_call.1} parent=1 // loop_footer_branch
      %16 = sbr.rel target = $region3
    $region8: #{tpu_custom_call.1} parent=1 // loop_exit
      _
    %388 = vsyncpa [#allocation3], 1
    %s389 = scalar_lea.sflag [#allocation3], 1
    %390 = vsyncpa %s389, 1
    %391 = vsyncpa [#allocation6], 1
    %s392 = scalar_lea.sflag [#allocation6], 1
    %393 = vsyncpa %s392, 1
    %394 = vsyncpa [#allocation4], 1
    %s395 = scalar_lea.sflag [#allocation4], 1
    %396 = vsyncpa %s395, 1

</llo_original>
